<compile_context>
chip_gen: v7x
topology: tpu7x:2x2x1
jax: 0.10.0
libtpu: 0.0.40
codegen_flags: <defaults>
</compile_context>

<pallas_src>
import jax
import jax.numpy as jnp
from jax import lax
from jax.experimental import pallas as pl
from jax.experimental.pallas import tpu as pltpu


# ~4 MiB blocks amortize the ~0.35us/grid-step overhead; pass B holds ~5-6x a
# block live (2 in-bufs + 2 out-bufs + f32 temps), which fits v7x's 64 MiB
# physical VMEM with headroom and is comfortable on v5e/v6e (128 MiB).
_BLOCK_BUDGET_BYTES = 4 * 1024 * 1024
# Raise scoped VMEM explicitly (defaults are 16 MiB v5e / 32 MiB v6e+).
_VMEM_LIMIT_BYTES = 48 * 1024 * 1024


# --------------------------------------------------------------- pass A -----
def _stats_kernel(x_ref, pivot_ref, s1_ref, s2_ref, acc1_ref, acc2_ref):
    """Accumulate per-channel shifted sums over the (n, l) reduction axes.

    x_ref:     (TN, TC, TL) input tile.
    pivot_ref: (TC, 1) f32 per-channel shift (roughly the channel mean).
    s1_ref:    (1, TC, 1) f32 output block: sum(x - pivot).
    s2_ref:    (1, TC, 1) f32 output block: sum((x - pivot)^2).
    acc*_ref:  (TC, TL) f32 lane-wide scratch accumulators — the cross-lane
               XLU reduce and the output pack run once per channel block, not
               per (n, l) step.
    """
    n_id = pl.program_id(2)
    l_id = pl.program_id(3)

    @pl.when((n_id == 0) & (l_id == 0))
    def _init():
        acc1_ref[...] = jnp.zeros_like(acc1_ref)
        acc2_ref[...] = jnp.zeros_like(acc2_ref)

    d = x_ref[...].astype(jnp.float32) - pivot_ref[...]     # (TN, TC, TL)
    acc1_ref[...] += jnp.sum(d, axis=0)                     # (TC, TL), VPU adds
    acc2_ref[...] += jnp.sum(d * d, axis=0)

    @pl.when((n_id == pl.num_programs(2) - 1) & (l_id == pl.num_programs(3) - 1))
    def _finalize():
        s1_ref[...] = jnp.sum(acc1_ref[...], axis=1, keepdims=True)[None, :, :]
        s2_ref[...] = jnp.sum(acc2_ref[...], axis=1, keepdims=True)[None, :, :]


# --------------------------------------------------------------- pass B -----
def _normalize_kernel(x_ref, scale_ref, bias_ref, o_ref):
    """y = x * scale + bias with folded per-channel scale/bias."""
    a = scale_ref[...]                                      # (TC, 1) f32
    b = bias_ref[...]                                       # (TC, 1) f32
    y = x_ref[...].astype(jnp.float32) * a + b              # f32 only per-tile
    o_ref[...] = y.astype(o_ref.dtype)


# ---------------------------------------------------------- tile pickers ----
def _divisors(n):
    ds = []
    i = 1
    while i * i <= n:
        if n % i == 0:
            ds.append(i)
            if i != n // i:
                ds.append(n // i)
        i += 1
    return sorted(ds)


def _pick_tiles(N, C, Lp, itemsize, block_n, block_c, block_l):
    """Unified picker: grow tl, then tc, then tn until the block fills the
    budget (lane axis first so stores stay dense and wide)."""
    budget_elems = max(1, _BLOCK_BUDGET_BYTES // itemsize)

    # Lane (last) dim: a 128-multiple divisor of Lp, capped so at least 8
    # channels still fit in the budget (keeps the scratch accumulators and the
    # channel tile sane for very long L).
    if block_l is not None:
        tl = block_l
    elif Lp % 128 == 0:
        cap = max(128, budget_elems // 8)
        cands = [128 * d for d in _divisors(Lp // 128) if 128 * d <= cap]
        tl = max(cands) if cands else 128
    else:
        tl = Lp                       # small unaligned L: full-dim block

    # Channel (sublane) dim: full C if it fits, else the largest multiple-of-8
    # divisor that does (8 | tc or tc == C is required by the (8,128) rule).
    if block_c is not None:
        tc = block_c
    else:
        rem = max(1, budget_elems // tl)
        if C <= rem:
            tc = C
        else:
            cands = [d for d in _divisors(C) if d % 8 == 0 and d <= rem]
            if cands:
                tc = max(cands)
            else:
                sub = [d for d in _divisors(C) if d % 8 == 0]
                tc = min(sub) if sub else C

    # Batch dim: whatever budget is left.
    if block_n is not None:
        tn = block_n
    else:
        rem = max(1, budget_elems // (tl * tc))
        tn = max(d for d in _divisors(N) if d <= rem)

    return tn, tc, tl


# -------------------------------------------------------------- wrapper -----
def sync_batch_norm_1d(x, gamma, beta, eps=1e-5, *,
                       block_n=None, block_c=None, block_l=None):
    """Training-mode (Sync)BatchNorm over (N, C, L) using batch statistics."""
    N, C, L = x.shape
    itemsize = x.dtype.itemsize
    count = float(N * L)              # real element count per channel

    # Per-channel pivot ~ channel mean (sampled cheaply from position 0),
    # snapped to x.dtype so padded elements contribute exactly zero to the
    # shifted sums.  Shifting makes E[d^2] - E[d]^2 numerically robust.
    pivot = jnp.mean(x[:, :, 0].astype(jnp.float32), axis=0)
    pivot = pivot.astype(x.dtype).astype(jnp.float32)        # (C,), snapped

    # Lane-dense padding of large, non-128-aligned L (pad value = pivot so the
    # stats are untouched); tiny L keeps the full-dim block instead (the extra
    # pad/slice copies would cost more than the masked stores they avoid).
    pad_l = (-L) % 128
    do_pad = (pad_l != 0) and (L > 256)
    if do_pad:
        pad_block = jnp.broadcast_to(
            pivot.astype(x.dtype).reshape(1, C, 1), (N, C, pad_l))
        x_work = jnp.concatenate([x, pad_block], axis=2)
    else:
        x_work = x
    Lp = x_work.shape[2]

    tn, tc, tl = _pick_tiles(N, C, Lp, itemsize, block_n, block_c, block_l)
    assert N % tn == 0 and C % tc == 0 and Lp % tl == 0, "blocks must divide dims"
    n_steps, c_steps, l_steps = N // tn, C // tc, Lp // tl
    nbytes = N * C * Lp * itemsize

    # Leading parallel axis P splits the reduction so the stats pass can use
    # both v7x TensorCores even when C tiles to a single block.
    if c_steps >= 2:
        P, split = 1, None
    elif l_steps % 2 == 0 and l_steps >= 2:
        P, split = 2, "l"
    elif n_steps % 2 == 0 and n_steps >= 2:
        P, split = 2, "n"
    else:
        P, split = 1, None

    if split == "l":
        n_in, l_in = n_steps, l_steps // P
        x_map_a = lambda p, c, n, l: (n, c, p * l_in + l)
    elif split == "n":
        n_in, l_in = n_steps // P, l_steps
        x_map_a = lambda p, c, n, l: (p * n_in + n, c, l)
    else:
        n_in, l_in = n_steps, l_steps
        x_map_a = lambda p, c, n, l: (n, c, l)
    grid_a = (P, c_steps, n_in, l_in)

    # ---- pass A: per-channel shifted partial sums in f32 ----
    s1_part, s2_part = pl.pallas_call(
        _stats_kernel,
        out_shape=(jax.ShapeDtypeStruct((P, C, 1), jnp.float32),
                   jax.ShapeDtypeStruct((P, C, 1), jnp.float32)),
        grid=grid_a,
        in_specs=[
            pl.BlockSpec((tn, tc, tl), x_map_a),
            pl.BlockSpec((tc, 1), lambda p, c, n, l: (c, 0)),
        ],
        out_specs=(
            pl.BlockSpec((1, tc, 1), lambda p, c, n, l: (p, c, 0)),
            pl.BlockSpec((1, tc, 1), lambda p, c, n, l: (p, c, 0)),
        ),
        scratch_shapes=[pltpu.VMEM((tc, tl), jnp.float32),
                        pltpu.VMEM((tc, tl), jnp.float32)],
        compiler_params=pltpu.CompilerParams(
            dimension_semantics=("parallel", "parallel", "arbitrary", "arbitrary"),
            vmem_limit_bytes=_VMEM_LIMIT_BYTES),
        cost_estimate=pl.CostEstimate(
            flops=4 * N * C * Lp, transcendentals=0,
            bytes_accessed=nbytes + 4 * C + 8 * C * P),
    )(x_work, pivot.reshape(C, 1))

    # ---- tiny per-channel glue (C elements): fold stats + affine params ----
    s1 = jnp.sum(s1_part[:, :, 0], axis=0)                  # (C,)
    s2 = jnp.sum(s2_part[:, :, 0], axis=0)                  # (C,)
    mean_shift = s1 / count
    mean = pivot + mean_shift
    var = jnp.maximum(s2 / count - mean_shift * mean_shift, 0.0)  # biased var
    inv_std = lax.rsqrt(var + eps)
    scale = gamma.astype(jnp.float32).reshape(C) * inv_std
    bias = beta.astype(jnp.float32).reshape(C) - mean * scale

    # ---- pass B: elementwise normalize, lane-dense blocks, all-parallel ----
    # (Pipeline depth left at the default Buffered(2); raise only if profiling
    # shows exposed DMA, since a third buffer eats VMEM headroom on v7x.)
    y = pl.pallas_call(
        _normalize_kernel,
        out_shape=jax.ShapeDtypeStruct((N, C, Lp), x.dtype),
        grid=(n_steps, c_steps, l_steps),
        in_specs=[
            pl.BlockSpec((tn, tc, tl), lambda n, c, l: (n, c, l)),
            pl.BlockSpec((tc, 1), lambda n, c, l: (c, 0)),
            pl.BlockSpec((tc, 1), lambda n, c, l: (c, 0)),
        ],
        out_specs=pl.BlockSpec((tn, tc, tl), lambda n, c, l: (n, c, l)),
        compiler_params=pltpu.CompilerParams(
            dimension_semantics=("parallel", "parallel", "parallel"),
            vmem_limit_bytes=_VMEM_LIMIT_BYTES),
        cost_estimate=pl.CostEstimate(
            flops=2 * N * C * Lp, transcendentals=0,
            bytes_accessed=2 * nbytes + 8 * C),
    )(x_work, scale.reshape(C, 1), bias.reshape(C, 1))

    if do_pad:
        y = y[:, :, :L]
    return y


# ------------------------------------------------------------ reference -----
def _reference_bn(x, gamma, beta, eps=1e-5):
    xf = x.astype(jnp.float32)
    mean = jnp.mean(xf, axis=(0, 2), keepdims=True)
    var = jnp.mean((xf - mean) ** 2, axis=(0, 2), keepdims=True)
    y = (xf - mean) / jnp.sqrt(var + eps)
    return (y * gamma.reshape(1, -1, 1) + beta.reshape(1, -1, 1)).astype(x.dtype)


if __name__ == "__main__":
    key = jax.random.PRNGKey(0)

    def check(shape, dtype=jnp.float32, atol=1e-4, rtol=1e-4, **tile_kwargs):
        N, C, L = shape
        kx, kg, kb = jax.random.split(
            jax.random.fold_in(key, N * 1000003 + C * 131 + L), 3)
        x = jax.random.normal(kx, (N, C, L), dtype=jnp.float32).astype(dtype)
        # PyTorch default init is gamma=1, beta=0; perturb so the affine path
        # is exercised.
        gamma = 1.0 + 0.1 * jax.random.normal(kg, (C,), dtype=jnp.float32)
        beta = 0.1 * jax.random.normal(kb, (C,), dtype=jnp.float32)

        out = sync_batch_norm_1d(x, gamma, beta, **tile_kwargs)
        out = jax.block_until_ready(out)
        ref = _reference_bn(x, gamma, beta)
        assert out.shape == (N, C, L)
        ok = jnp.allclose(out.astype(jnp.float32), ref.astype(jnp.float32),
                          atol=atol, rtol=rtol)
        assert ok, f"mismatch at {shape} ({dtype})"

    # Small shapes consistent with 1-D batch norm (N, C, L).
    check((2, 4, 16))                               # tiny, unaligned L -> full-dim blocks
    check((4, 8, 512))                              # lane-dense single-block case
    check((4, 8, 512), block_n=2, block_l=128)      # multi-step reduction + P-split
    check((2, 256, 256), block_c=64)                # channel-tiled (parallel C axis)
    check((3, 8, 389), block_l=128)                 # padded L path + P-split
    check((2, 8, 256), dtype=jnp.bfloat16, atol=3e-2, rtol=3e-2)   # bf16 path

    print("KERNEL_OK")
</pallas_src>

<mosaic_0001>
module attributes {stable_mosaic.version = 11 : i64} {
  func.func @_stats_kernel(%arg0: i32, %arg1: i32, %arg2: i32, %arg3: i32, %arg4: memref<2x4x16xf32, #tpu.memory_space<vmem>>, %arg5: memref<4x1xf32, #tpu.memory_space<vmem>>, %arg6: memref<1x4x1xf32, #tpu.memory_space<vmem>>, %arg7: memref<1x4x1xf32, #tpu.memory_space<vmem>>, %arg8: memref<4x16xf32, #tpu.memory_space<vmem>>, %arg9: memref<4x16xf32, #tpu.memory_space<vmem>>) attributes {dimension_semantics = [#tpu.dimension_semantics<parallel>, #tpu.dimension_semantics<parallel>, #tpu.dimension_semantics<arbitrary>, #tpu.dimension_semantics<arbitrary>], iteration_bounds = array<i64: 1, 1, 1, 1>, scalar_prefetch = 0 : i64, scratch_operands = 2 : i64, tpu.core_type = #tpu.core_type<tc>, window_params = [{transform_indices = @transform_0, window_bounds = array<i64: 2, 4, 16>}, {transform_indices = @transform_1, window_bounds = array<i64: 4, 1>}, {transform_indices = @transform_2, window_bounds = array<i64: 1, 4, 1>}, {transform_indices = @transform_3, window_bounds = array<i64: 1, 4, 1>}]} {
    %c0_i32 = arith.constant 0 : i32
    %0 = arith.cmpi eq, %arg2, %c0_i32 : i32
    %c0_i32_0 = arith.constant 0 : i32
    %1 = arith.cmpi eq, %arg3, %c0_i32_0 : i32
    %2 = arith.andi %0, %1 : i1
    %3 = arith.extui %2 : i1 to i32
    %c0_i32_1 = arith.constant 0 : i32
    %4 = arith.cmpi ne, %3, %c0_i32_1 : i32
    scf.if %4 {
      %cst_18 = arith.constant 0.000000e+00 : f32
      %24 = vector.broadcast %cst_18 : f32 to vector<4x16xf32>
      %c0_19 = arith.constant 0 : index
      %c0_20 = arith.constant 0 : index
      %25 = vector.load %arg8[%c0_19, %c0_20] : memref<4x16xf32, #tpu.memory_space<vmem>>, vector<4x16xf32>
      tpu.vector_store %arg8[%c0_19, %c0_20], %24 {strides = array<i32>} : memref<4x16xf32, #tpu.memory_space<vmem>>, vector<4x16xf32>,
      %cst_21 = arith.constant 0.000000e+00 : f32
      %26 = vector.broadcast %cst_21 : f32 to vector<4x16xf32>
      %c0_22 = arith.constant 0 : index
      %c0_23 = arith.constant 0 : index
      %27 = vector.load %arg9[%c0_22, %c0_23] : memref<4x16xf32, #tpu.memory_space<vmem>>, vector<4x16xf32>
      tpu.vector_store %arg9[%c0_22, %c0_23], %26 {strides = array<i32>} : memref<4x16xf32, #tpu.memory_space<vmem>>, vector<4x16xf32>,
    } else {
    }
    %c0 = arith.constant 0 : index
    %c0_2 = arith.constant 0 : index
    %c0_3 = arith.constant 0 : index
    %5 = vector.load %arg4[%c0, %c0_2, %c0_3] : memref<2x4x16xf32, #tpu.memory_space<vmem>>, vector<2x4x16xf32>
    %c0_4 = arith.constant 0 : index
    %c0_5 = arith.constant 0 : index
    %6 = vector.load %arg5[%c0_4, %c0_5] : memref<4x1xf32, #tpu.memory_space<vmem>>, vector<4x1xf32>
    %7 = vector.shape_cast %6 : vector<4x1xf32> to vector<1x4x1xf32>
    %8 = vector.broadcast %7 : vector<1x4x1xf32> to vector<2x4x16xf32>
    %9 = arith.subf %5, %8 : vector<2x4x16xf32>
    %c0_6 = arith.constant 0 : index
    %c0_7 = arith.constant 0 : index
    %10 = vector.load %arg8[%c0_6, %c0_7] : memref<4x16xf32, #tpu.memory_space<vmem>>, vector<4x16xf32>
    %cst = arith.constant dense<0.000000e+00> : vector<4x16xf32>
    %11 = vector.multi_reduction <add>, %9, %cst [0] : vector<2x4x16xf32> to vector<4x16xf32>
    %12 = arith.addf %10, %11 : vector<4x16xf32>
    %c0_8 = arith.constant 0 : index
    %c0_9 = arith.constant 0 : index
    %13 = vector.load %arg8[%c0_8, %c0_9] : memref<4x16xf32, #tpu.memory_space<vmem>>, vector<4x16xf32>
    tpu.vector_store %arg8[%c0_8, %c0_9], %12 {strides = array<i32>} : memref<4x16xf32, #tpu.memory_space<vmem>>, vector<4x16xf32>,
    %c0_10 = arith.constant 0 : index
    %c0_11 = arith.constant 0 : index
    %14 = vector.load %arg9[%c0_10, %c0_11] : memref<4x16xf32, #tpu.memory_space<vmem>>, vector<4x16xf32>
    %15 = arith.mulf %9, %9 : vector<2x4x16xf32>
    %cst_12 = arith.constant dense<0.000000e+00> : vector<4x16xf32>
    %16 = vector.multi_reduction <add>, %15, %cst_12 [0] : vector<2x4x16xf32> to vector<4x16xf32>
    %17 = arith.addf %14, %16 : vector<4x16xf32>
    %c0_13 = arith.constant 0 : index
    %c0_14 = arith.constant 0 : index
    %18 = vector.load %arg9[%c0_13, %c0_14] : memref<4x16xf32, #tpu.memory_space<vmem>>, vector<4x16xf32>
    tpu.vector_store %arg9[%c0_13, %c0_14], %17 {strides = array<i32>} : memref<4x16xf32, #tpu.memory_space<vmem>>, vector<4x16xf32>,
    %c0_i32_15 = arith.constant 0 : i32
    %19 = arith.cmpi eq, %arg2, %c0_i32_15 : i32
    %c0_i32_16 = arith.constant 0 : i32
    %20 = arith.cmpi eq, %arg3, %c0_i32_16 : i32
    %21 = arith.andi %19, %20 : i1
    %22 = arith.extui %21 : i1 to i32
    %c0_i32_17 = arith.constant 0 : i32
    %23 = arith.cmpi ne, %22, %c0_i32_17 : i32
    scf.if %23 {
      %c0_18 = arith.constant 0 : index
      %c0_19 = arith.constant 0 : index
      %24 = vector.load %arg8[%c0_18, %c0_19] : memref<4x16xf32, #tpu.memory_space<vmem>>, vector<4x16xf32>
      %cst_20 = arith.constant dense<0.000000e+00> : vector<4xf32>
      %25 = vector.multi_reduction <add>, %24, %cst_20 [1] : vector<4x16xf32> to vector<4xf32>
      %26 = vector.shape_cast %25 : vector<4xf32> to vector<4x1xf32>
      %27 = vector.shape_cast %26 : vector<4x1xf32> to vector<1x4x1xf32>
      %c0_21 = arith.constant 0 : index
      %c0_22 = arith.constant 0 : index
      %c0_23 = arith.constant 0 : index
      %28 = vector.load %arg6[%c0_21, %c0_22, %c0_23] : memref<1x4x1xf32, #tpu.memory_space<vmem>>, vector<1x4x1xf32>
      tpu.vector_store %arg6[%c0_21, %c0_22, %c0_23], %27 {strides = array<i32>} : memref<1x4x1xf32, #tpu.memory_space<vmem>>, vector<1x4x1xf32>,
      %c0_24 = arith.constant 0 : index
      %c0_25 = arith.constant 0 : index
      %29 = vector.load %arg9[%c0_24, %c0_25] : memref<4x16xf32, #tpu.memory_space<vmem>>, vector<4x16xf32>
      %cst_26 = arith.constant dense<0.000000e+00> : vector<4xf32>
      %30 = vector.multi_reduction <add>, %29, %cst_26 [1] : vector<4x16xf32> to vector<4xf32>
      %31 = vector.shape_cast %30 : vector<4xf32> to vector<4x1xf32>
      %32 = vector.shape_cast %31 : vector<4x1xf32> to vector<1x4x1xf32>
      %c0_27 = arith.constant 0 : index
      %c0_28 = arith.constant 0 : index
      %c0_29 = arith.constant 0 : index
      %33 = vector.load %arg7[%c0_27, %c0_28, %c0_29] : memref<1x4x1xf32, #tpu.memory_space<vmem>>, vector<1x4x1xf32>
      tpu.vector_store %arg7[%c0_27, %c0_28, %c0_29], %32 {strides = array<i32>} : memref<1x4x1xf32, #tpu.memory_space<vmem>>, vector<1x4x1xf32>,
    } else {
    }
    return
  }
  func.func @transform_0(%arg0: i32, %arg1: i32, %arg2: i32, %arg3: i32) -> (i32, i32, i32) {
    %c0_i32 = arith.constant 0 : i32
    return %arg2, %arg1, %arg3 : i32, i32, i32
  }
  func.func @transform_1(%arg0: i32, %arg1: i32, %arg2: i32, %arg3: i32) -> (i32, i32) {
    %c0_i32 = arith.constant 0 : i32
    %c0_i32_0 = arith.constant 0 : i32
    return %arg1, %c0_i32 : i32, i32
  }
  func.func @transform_2(%arg0: i32, %arg1: i32, %arg2: i32, %arg3: i32) -> (i32, i32, i32) {
    %c0_i32 = arith.constant 0 : i32
    %c0_i32_0 = arith.constant 0 : i32
    return %arg0, %arg1, %c0_i32 : i32, i32, i32
  }
  func.func @transform_3(%arg0: i32, %arg1: i32, %arg2: i32, %arg3: i32) -> (i32, i32, i32) {
    %c0_i32 = arith.constant 0 : i32
    %c0_i32_0 = arith.constant 0 : i32
    return %arg0, %arg1, %c0_i32 : i32, i32, i32
  }
}

</mosaic_0001>

<llo_original>
// kernel: tpu_custom_call.1
$region0: #{tpu_custom_call.1}
  #allocation0 [shape = 'u32[]', space=smem, size = 0x4, offset = 0x4, fixed_abs, tag = 'smem constant byte address 0x4 - core index']
  #allocation1 [shape = 'u32[144,128]{1,0:T(1,128)}', space=vmem, size = 0x12000, scoped, tag = 'internal scratch']
  #allocation2 [shape = 'f32[4,16]{1,0:T(4,128)}', space=vmem, size = 0x800, scoped, tag = 'scratch operand']
  #allocation3 [shape = 'f32[4,16]{1,0:T(4,128)}', space=vmem, size = 0x800, scoped, tag = 'scratch operand']
  %s0 = inlined_call_operand.hbm [shape: f32[2,4,16], index: 0, kind: input, shape index: {}]
  %s1 = inlined_call_operand.vmem [shape: f32[4,1], index: 1, kind: input, shape index: {}]
  %s2 = inlined_call_operand.vmem [shape: f32[1,4,1], index: 2, kind: output, shape index: {0}]
  %s3 = inlined_call_operand.vmem [shape: f32[1,4,1], index: 3, kind: output, shape index: {1}]
  %4 = xla_tuple %s2, %s3
  %s5 = sld [smem:[#allocation0]]
  $region38: #{tpu_custom_call.1} parent=0
    _
  %s7 = ssub.s32 1, %s5
  %s8 = scalar_select 0, %s7, %s5
  $region1: #{tpu_custom_call.1} parent=0
    #allocation4 [shape = 'u8[4096]{0}', space=vmem, size = 0x1000, scoped, tag = 'input window, operand 0, single buffered']
    #allocation5 [shape = 's32[1]{0}', space=sflag, size = 0x4, scoped, tag = 'scoped memory for tpu_custom_call.1']
    %9 = vsyncpa [#allocation5], 0
    // Predicated region
    $region2: #{tpu_custom_call.1} parent=1 // pred_check
      _
    $region3: #{tpu_custom_call.1} parent=1 // pred_check_branch
      %11 = sbr.rel (0) target = $region5
    $region4: #{tpu_custom_call.1} parent=1 // pred_region
      %s13 = ssub.s32 128, 128
      %14 = vsyncadd [#allocation5], %s13
      %s15 = sshll.u32 [#allocation4], 4
      %s16 = int_to_ptr.vmem [resolvable:$true] %s15
      %21 = dma.hbm_to_vmem [thread:$0]  %s0, 128, %s16, [#allocation5], 64, 64, 4
    $region5: #{tpu_custom_call.1} parent=1 // pred_fallthru
      _
    // Predicated region
    $region6: #{tpu_custom_call.1} parent=1 // pred_check
      _
    $region7: #{tpu_custom_call.1} parent=1 // pred_check_branch
      %23 = sbr.rel (0) target = $region9
    $region8: #{tpu_custom_call.1} parent=1 // pred_region
      _
    $region9: #{tpu_custom_call.1} parent=1 // pred_fallthru
      _
    // Predicated region
    $region10: #{tpu_custom_call.1} parent=1 // pred_check
      _
    $region11: #{tpu_custom_call.1} parent=1 // pred_check_branch
      %25 = sbr.rel (0) target = $region13
    $region12: #{tpu_custom_call.1} parent=1 // pred_region
      %26 = dma.done [#allocation5], 128
    $region13: #{tpu_custom_call.1} parent=1 // pred_fallthru
      _
    %p27 = scmp.eq.s32.totalorder 0, 0
    %p28 = scmp.eq.s32.totalorder 0, 0
    %p29 = pnand %p27, %p28
    %p30 = pneg %p29
    // Predicated region
    $region14: #{tpu_custom_call.1} parent=1 // pred_check
      _
    $region15: #{tpu_custom_call.1} parent=1 // pred_check_branch
      %32 = sbr.rel (%p29) target = $region17
    $region16: #{tpu_custom_call.1} parent=1 // pred_region
      %vm33 = vcmask 125952
      %34 = vst.msk [vmem:[#allocation2] sm:$0xf] %vm33, 0.0
      %35 = vst.msk [vmem:[#allocation3] sm:$0xf] %vm33, 0.0
    $region17: #{tpu_custom_call.1} parent=1 // pred_fallthru
      _
    %v36 = vld [vmem:[#allocation4] sm:$0xf]
    %v37 = vld [vmem:[#allocation4 + $0x4] sm:$0xf]
    %v38 = vld [vmem:[%s1] sm:$0xf]
    %40 = vset.pattern.permute.xlu0 0
    %41 = vperm.xlu0 %40, %v38
    %v42 = vpop.permute.xlu0 %41
    %v44 = vsub.f32 %v36, %v42
    %v45 = vsub.f32 %v37, %v42
    %v46 = vld [vmem:[#allocation2] sm:$0xf]
    %vm47 = vcmask 125952
    %v48 = vsel %vm47, %v44, 0.0
    %v49 = vsel %vm47, %v45, 0.0
    %v50 = vadd.f32 %v48, %v49
    %v51 = vadd.f32 %v46, %v50
    %52 = vst.msk [vmem:[#allocation2] sm:$0xf] %vm47, %v51
    %v53 = vld [vmem:[#allocation3] sm:$0xf]
    %v54 = vmul.f32 %v44, %v44
    %v55 = vmul.f32 %v45, %v45
    %v56 = vsel %vm47, %v54, 0.0
    %v57 = vsel %vm47, %v55, 0.0
    %v58 = vadd.f32 %v56, %v57
    %v59 = vadd.f32 %v53, %v58
    %60 = vst.msk [vmem:[#allocation3] sm:$0xf] %vm47, %v59
    // Predicated region
    $region18: #{tpu_custom_call.1} parent=1 // pred_check
      _
    $region19: #{tpu_custom_call.1} parent=1 // pred_check_branch
      %62 = sbr.rel (%p29) target = $region21
    $region20: #{tpu_custom_call.1} parent=1 // pred_region
      %v63 = vld [vmem:[#allocation2] sm:$0xf]
      %v64 = vsel %vm47, %v63, 0.0
      %65 = vadd.xlane.f32.xlu0 %v64
      %v66 = vpop.xlane.xlu0 %65
      %vm67 = vcmask 3072
      %68 = vst.msk [vmem:[%s2] sm:$0xf] %vm67, %v66
      %v69 = vld [vmem:[#allocation3] sm:$0xf]
      %v70 = vsel %vm47, %v69, 0.0
      %71 = vadd.xlane.f32.xlu0 %v70
      %v72 = vpop.xlane.xlu0 %71
      %73 = vst.msk [vmem:[%s3] sm:$0xf] %vm67, %v72
    $region21: #{tpu_custom_call.1} parent=1 // pred_fallthru
      _
    // Predicated region
    $region22: #{tpu_custom_call.1} parent=1 // pred_check
      _
    $region23: #{tpu_custom_call.1} parent=1 // pred_check_branch
      %75 = sbr.rel (0) target = $region25
    $region24: #{tpu_custom_call.1} parent=1 // pred_region
      _
    $region25: #{tpu_custom_call.1} parent=1 // pred_fallthru
      _
    // Predicated region
    $region26: #{tpu_custom_call.1} parent=1 // pred_check
      _
    $region27: #{tpu_custom_call.1} parent=1 // pred_check_branch
      %77 = sbr.rel (0) target = $region29
    $region28: #{tpu_custom_call.1} parent=1 // pred_region
      _
    $region29: #{tpu_custom_call.1} parent=1 // pred_fallthru
      _
    // Predicated region
    $region30: #{tpu_custom_call.1} parent=1 // pred_check
      _
    $region31: #{tpu_custom_call.1} parent=1 // pred_check_branch
      %79 = sbr.rel (0) target = $region33
    $region32: #{tpu_custom_call.1} parent=1 // pred_region
      _
    $region33: #{tpu_custom_call.1} parent=1 // pred_fallthru
      _
    // Predicated region
    $region34: #{tpu_custom_call.1} parent=1 // pred_check
      _
    $region35: #{tpu_custom_call.1} parent=1 // pred_check_branch
      %81 = sbr.rel (0) target = $region37
    $region36: #{tpu_custom_call.1} parent=1 // pred_region
      _
    $region37: #{tpu_custom_call.1} parent=1 // pred_fallthru
      _
    %82 = vsyncpa [#allocation5], 1

</llo_original>
